<compile_context>
chip_gen: v5e
topology: v5e:2x2
jax: 0.10.0
libtpu: 0.0.40
codegen_flags: <defaults>
</compile_context>

<pallas_src>
import jax
import jax.numpy as jnp
from jax.experimental import pallas as pl
from jax.experimental.pallas import tpu as pltpu


def _round_up(a: int, b: int) -> int:
    return ((a + b - 1) // b) * b


def ffn_kernel_fused(x_ref, w1_ref, b1_ref, w2_ref, b2_ref, o_ref):
    """Single-chunk path: one (tile_m, D) row tile, full H resident."""
    h = jnp.dot(x_ref[...], w1_ref[...],
                preferred_element_type=jnp.float32)              # (tm, H) f32
    h = jnp.maximum(h + b1_ref[...].astype(jnp.float32), 0.0)
    # TODO(synk): training-mode dropout would mask `h` here via
    # pltpu.prng_seed / pltpu.prng_random_bits; inference dropout is identity.
    y = jnp.dot(h.astype(w2_ref.dtype), w2_ref[...],
                preferred_element_type=jnp.float32)              # (tm, D) f32
    o_ref[...] = (y + b2_ref[...].astype(jnp.float32)).astype(o_ref.dtype)


def ffn_kernel_chunked(x_ref, w1_ref, b1_ref, w2_ref, b2_ref, o_ref, acc_ref):
    """Chunked path: one (tile_m, D) row tile x one tile_h hidden chunk."""
    k = pl.program_id(1)

    @pl.when(k == 0)
    def _init():
        acc_ref[...] = jnp.zeros_like(acc_ref)

    # First linear (native-dtype operands on the MXU, f32 accumulate),
    # bias add + ReLU in f32 on the VPU.
    h = jnp.dot(x_ref[...], w1_ref[...],
                preferred_element_type=jnp.float32)              # (tm, th) f32
    h = jnp.maximum(h + b1_ref[...].astype(jnp.float32), 0.0)
    # TODO(synk): training-mode dropout would mask `h` here (identity at inference).

    # Second linear for this hidden chunk; accumulate into f32 scratch.
    acc_ref[...] += jnp.dot(h.astype(w2_ref.dtype), w2_ref[...],
                            preferred_element_type=jnp.float32)  # (tm, D) f32

    @pl.when(k == pl.num_programs(1) - 1)
    def _finalize():
        y = acc_ref[...] + b2_ref[...].astype(jnp.float32)
        o_ref[...] = y.astype(o_ref.dtype)


def positionwise_feed_forward(x, w1, b1, w2, b2, *, tile_m=256, tile_h=None):
    """x: (B, L, D). w1: (D, H), b1: (H,), w2: (H, D), b2: (D,). -> (B, L, D)."""
    B, L, D = x.shape
    H = w1.shape[1]
    M = B * L

    # --- tiling --------------------------------------------------------------
    # Row tile: multiple of 8 sublanes, never larger than the (padded) slab.
    tile_m = max(8, _round_up(min(tile_m, _round_up(M, 8)), 8))
    M_pad = _round_up(M, tile_m)

    # Hidden-dim chunk: keep full H for small/medium FFNs (weights fully
    # resident across all row tiles, fused kernel); stream 1024-wide chunks
    # when H is very large to bound the live ReLU intermediate and the
    # per-step weight slices.
    if tile_h is None:
        tile_h = 1024 if (H > 2048 and H % 1024 == 0) else H
    tile_h = min(tile_h, H)
    if H % tile_h != 0:
        tile_h = H
    n_k = H // tile_h

    # --- operands ------------------------------------------------------------
    x2d = x.reshape(M, D)
    if M_pad != M:
        x2d = jnp.pad(x2d, ((0, M_pad - M), (0, 0)))
    b1r = b1.reshape(1, H)
    b2r = b2.reshape(1, D)

    # --- VMEM budget / scheduler hints ---------------------------------------
    x_bytes = jnp.dtype(x.dtype).itemsize
    w_bytes = jnp.dtype(w1.dtype).itemsize
    vmem_needed = (
        2 * tile_m * D * x_bytes                      # x tile, double-buffered
        + 2 * tile_m * D * x_bytes                    # out tile, double-buffered
        + 2 * (D * tile_h + tile_h * D) * w_bytes     # W1/W2 chunks, double-buffered
        + 2 * (tile_h + D) * w_bytes                  # biases
        + tile_m * D * 4                              # f32 accumulator (chunked path)
        + tile_m * tile_h * 4                         # ReLU intermediate headroom
    )
    # Clamp to 64 MiB so the same limit is valid on v5e/v6e (128 MiB) and v7x (64 MiB).
    vmem_limit = int(min(max(vmem_needed * 3 // 2, 32 * 1024 * 1024),
                         64 * 1024 * 1024))

    cost = pl.CostEstimate(
        flops=4 * M * D * H,                          # two matmuls
        transcendentals=0,
        bytes_accessed=(2 * M * D * x_bytes           # x in + y out
                        + (D * H + H * D + H + D) * w_bytes),
    )
    compiler_params_1d = pltpu.CompilerParams(
        dimension_semantics=("parallel",), vmem_limit_bytes=vmem_limit)
    compiler_params_2d = pltpu.CompilerParams(
        dimension_semantics=("parallel", "arbitrary"), vmem_limit_bytes=vmem_limit)

    if n_k == 1:
        # Fused path: 1-D grid over row tiles, weights constant-index (stay
        # resident in VMEM), output written directly -- no scratch traffic.
        out2d = pl.pallas_call(
            ffn_kernel_fused,
            out_shape=jax.ShapeDtypeStruct((M_pad, D), x.dtype),
            grid_spec=pltpu.PrefetchScalarGridSpec(
                num_scalar_prefetch=0,
                grid=(M_pad // tile_m,),
                in_specs=[
                    pl.BlockSpec((tile_m, D), lambda i: (i, 0)),  # x rows
                    pl.BlockSpec((D, H), lambda i: (0, 0)),       # W1 (resident)
                    pl.BlockSpec((1, H), lambda i: (0, 0)),       # b1
                    pl.BlockSpec((H, D), lambda i: (0, 0)),       # W2 (resident)
                    pl.BlockSpec((1, D), lambda i: (0, 0)),       # b2
                ],
                out_specs=pl.BlockSpec((tile_m, D), lambda i: (i, 0)),
            ),
            compiler_params=compiler_params_1d,
            cost_estimate=cost,
        )(x2d, w1, b1r, w2, b2r)
    else:
        # Chunked path: stream H on an inner "arbitrary" axis, f32 accumulator.
        out2d = pl.pallas_call(
            ffn_kernel_chunked,
            out_shape=jax.ShapeDtypeStruct((M_pad, D), x.dtype),
            grid_spec=pltpu.PrefetchScalarGridSpec(
                num_scalar_prefetch=0,
                grid=(M_pad // tile_m, n_k),
                in_specs=[
                    pl.BlockSpec((tile_m, D), lambda i, k: (i, 0)),   # x rows
                    pl.BlockSpec((D, tile_h), lambda i, k: (0, k)),   # W1 chunk
                    pl.BlockSpec((1, tile_h), lambda i, k: (0, k)),   # b1 chunk
                    pl.BlockSpec((tile_h, D), lambda i, k: (k, 0)),   # W2 chunk
                    pl.BlockSpec((1, D), lambda i, k: (0, 0)),        # b2
                ],
                out_specs=pl.BlockSpec((tile_m, D), lambda i, k: (i, 0)),
                scratch_shapes=[pltpu.VMEM((tile_m, D), jnp.float32)],
            ),
            compiler_params=compiler_params_2d,
            cost_estimate=cost,
        )(x2d, w1, b1r, w2, b2r)

    if M_pad != M:
        out2d = out2d[:M]
    return out2d.reshape(B, L, D)


if __name__ == "__main__":
    key = jax.random.PRNGKey(0)
    k_x, k_w1, k_b1, k_w2, k_b2 = jax.random.split(key, 5)

    # ---- main check: small (B, L, D) = (2, 8, 32), H = 64, f32 --------------
    B, L, D, H = 2, 8, 32, 64
    x = jax.random.normal(k_x, (B, L, D), dtype=jnp.float32)
    w1 = jax.random.normal(k_w1, (D, H), dtype=jnp.float32) * (1.0 / D**0.5)
    b1 = jax.random.normal(k_b1, (H,), dtype=jnp.float32) * 0.01
    w2 = jax.random.normal(k_w2, (H, D), dtype=jnp.float32) * (1.0 / H**0.5)
    b2 = jax.random.normal(k_b2, (D,), dtype=jnp.float32) * 0.01

    out = positionwise_feed_forward(x, w1, b1, w2, b2)
    out = jax.block_until_ready(out)
    ref = jnp.maximum(x @ w1 + b1, 0.0) @ w2 + b2
    assert out.shape == (B, L, D)
    assert jnp.allclose(out, ref, atol=1e-4, rtol=1e-4)

    # ---- padded-rows check: L = 7 so M = 14 is not a multiple of 8 ----------
    x_odd = jax.random.normal(k_x, (B, 7, D), dtype=jnp.float32)
    out_odd = positionwise_feed_forward(x_odd, w1, b1, w2, b2)
    out_odd = jax.block_until_ready(out_odd)
    ref_odd = jnp.maximum(x_odd @ w1 + b1, 0.0) @ w2 + b2
    assert out_odd.shape == (B, 7, D)
    assert jnp.allclose(out_odd, ref_odd, atol=1e-4, rtol=1e-4)

    # ---- chunked path check: force tile_h < H so the accumulator path runs --
    out_chunked = positionwise_feed_forward(x, w1, b1, w2, b2, tile_h=32)
    out_chunked = jax.block_until_ready(out_chunked)
    assert jnp.allclose(out_chunked, ref, atol=1e-4, rtol=1e-4)

    # ---- bf16 path: operands stay bf16 on the MXU, f32 accumulate -----------
    xb, w1b, b1b, w2b, b2b = (a.astype(jnp.bfloat16) for a in (x, w1, b1, w2, b2))
    out_bf = positionwise_feed_forward(xb, w1b, b1b, w2b, b2b)
    out_bf = jax.block_until_ready(out_bf)
    ref_bf = (jnp.maximum(xb.astype(jnp.float32) @ w1b.astype(jnp.float32)
                          + b1b.astype(jnp.float32), 0.0)
              @ w2b.astype(jnp.float32) + b2b.astype(jnp.float32))
    assert out_bf.dtype == jnp.bfloat16
    assert jnp.allclose(out_bf.astype(jnp.float32), ref_bf, atol=5e-2, rtol=5e-2)

    print("KERNEL_OK")
</pallas_src>

<mosaic_0001>
module attributes {stable_mosaic.version = 11 : i64} {
  func.func @ffn_kernel_fused(%arg0: i32, %arg1: memref<16x32xf32, #tpu.memory_space<vmem>>, %arg2: memref<32x64xf32, #tpu.memory_space<vmem>>, %arg3: memref<1x64xf32, #tpu.memory_space<vmem>>, %arg4: memref<64x32xf32, #tpu.memory_space<vmem>>, %arg5: memref<1x32xf32, #tpu.memory_space<vmem>>, %arg6: memref<16x32xf32, #tpu.memory_space<vmem>>) attributes {dimension_semantics = [#tpu.dimension_semantics<parallel>], iteration_bounds = array<i64: 1>, scalar_prefetch = 0 : i64, scratch_operands = 0 : i64, tpu.core_type = #tpu.core_type<tc>, window_params = [{transform_indices = @transform_0, window_bounds = array<i64: 16, 32>}, {pipeline_mode = #tpu.pipeline_mode<synchronous>, transform_indices = @transform_1, window_bounds = array<i64: 32, 64>}, {pipeline_mode = #tpu.pipeline_mode<synchronous>, transform_indices = @transform_2, window_bounds = array<i64: 1, 64>}, {pipeline_mode = #tpu.pipeline_mode<synchronous>, transform_indices = @transform_3, window_bounds = array<i64: 64, 32>}, {pipeline_mode = #tpu.pipeline_mode<synchronous>, transform_indices = @transform_4, window_bounds = array<i64: 1, 32>}, {transform_indices = @transform_5, window_bounds = array<i64: 16, 32>}]} {
    %c0 = arith.constant 0 : index
    %c0_0 = arith.constant 0 : index
    %0 = vector.load %arg1[%c0, %c0_0] : memref<16x32xf32, #tpu.memory_space<vmem>>, vector<16x32xf32>
    %c0_1 = arith.constant 0 : index
    %c0_2 = arith.constant 0 : index
    %1 = vector.load %arg2[%c0_1, %c0_2] : memref<32x64xf32, #tpu.memory_space<vmem>>, vector<32x64xf32>
    %cst = arith.constant dense<0.000000e+00> : vector<16x64xf32>
    %2 = tpu.matmul %0, %1, %cst {dimension_numbers = #tpu.dot_dimension_numbers<[1], [0], [0], [1], [0, 0, 1, 1], [], []>} : vector<16x32xf32>, vector<32x64xf32>, vector<16x64xf32> -> vector<16x64xf32>
    %c0_3 = arith.constant 0 : index
    %c0_4 = arith.constant 0 : index
    %3 = vector.load %arg3[%c0_3, %c0_4] : memref<1x64xf32, #tpu.memory_space<vmem>>, vector<1x64xf32>
    %4 = vector.broadcast %3 : vector<1x64xf32> to vector<16x64xf32>
    %5 = arith.addf %2, %4 : vector<16x64xf32>
    %cst_5 = arith.constant 0.000000e+00 : f32
    %6 = vector.broadcast %cst_5 : f32 to vector<16x64xf32>
    %7 = arith.maximumf %5, %6 : vector<16x64xf32>
    %c0_6 = arith.constant 0 : index
    %c0_7 = arith.constant 0 : index
    %8 = vector.load %arg4[%c0_6, %c0_7] : memref<64x32xf32, #tpu.memory_space<vmem>>, vector<64x32xf32>
    %cst_8 = arith.constant dense<0.000000e+00> : vector<16x32xf32>
    %9 = tpu.matmul %7, %8, %cst_8 {dimension_numbers = #tpu.dot_dimension_numbers<[1], [0], [0], [1], [0, 0, 1, 1], [], []>} : vector<16x64xf32>, vector<64x32xf32>, vector<16x32xf32> -> vector<16x32xf32>
    %c0_9 = arith.constant 0 : index
    %c0_10 = arith.constant 0 : index
    %10 = vector.load %arg5[%c0_9, %c0_10] : memref<1x32xf32, #tpu.memory_space<vmem>>, vector<1x32xf32>
    %11 = vector.broadcast %10 : vector<1x32xf32> to vector<16x32xf32>
    %12 = arith.addf %9, %11 : vector<16x32xf32>
    %c0_11 = arith.constant 0 : index
    %c0_12 = arith.constant 0 : index
    %13 = vector.load %arg6[%c0_11, %c0_12] : memref<16x32xf32, #tpu.memory_space<vmem>>, vector<16x32xf32>
    tpu.vector_store %arg6[%c0_11, %c0_12], %12 {strides = array<i32>} : memref<16x32xf32, #tpu.memory_space<vmem>>, vector<16x32xf32>,
    return
  }
  func.func @transform_0(%arg0: i32) -> (i32, i32) {
    %c0_i32 = arith.constant 0 : i32
    %c0_i32_0 = arith.constant 0 : i32
    return %arg0, %c0_i32 : i32, i32
  }
  func.func @transform_1(%arg0: i32) -> (i32, i32) {
    %c0_i32 = arith.constant 0 : i32
    %c0_i32_0 = arith.constant 0 : i32
    %c0_i32_1 = arith.constant 0 : i32
    return %c0_i32, %c0_i32_0 : i32, i32
  }
  func.func @transform_2(%arg0: i32) -> (i32, i32) {
    %c0_i32 = arith.constant 0 : i32
    %c0_i32_0 = arith.constant 0 : i32
    %c0_i32_1 = arith.constant 0 : i32
    return %c0_i32, %c0_i32_0 : i32, i32
  }
  func.func @transform_3(%arg0: i32) -> (i32, i32) {
    %c0_i32 = arith.constant 0 : i32
    %c0_i32_0 = arith.constant 0 : i32
    %c0_i32_1 = arith.constant 0 : i32
    return %c0_i32, %c0_i32_0 : i32, i32
  }
  func.func @transform_4(%arg0: i32) -> (i32, i32) {
    %c0_i32 = arith.constant 0 : i32
    %c0_i32_0 = arith.constant 0 : i32
    %c0_i32_1 = arith.constant 0 : i32
    return %c0_i32, %c0_i32_0 : i32, i32
  }
  func.func @transform_5(%arg0: i32) -> (i32, i32) {
    %c0_i32 = arith.constant 0 : i32
    %c0_i32_0 = arith.constant 0 : i32
    return %arg0, %c0_i32 : i32, i32
  }
}

</mosaic_0001>

<llo_original>
// kernel: tpu_custom_call.1
$region0: #{tpu_custom_call.1}
  #allocation0 [shape = 'u32[]', space=smem, size = 0x4, offset = 0x4, fixed_abs, tag = 'smem constant byte address 0x4 - core index']
  #allocation1 [shape = 'u32[72,128]{1,0:T(1,128)}', space=vmem, size = 0x9000, scoped, tag = 'internal scratch']
  %s0 = inlined_call_operand.vmem [shape: f32[16,32], index: 0, kind: input, shape index: {}]
  %s1 = inlined_call_operand.vmem [shape: f32[32,64], index: 1, kind: input, shape index: {}]
  %s2 = inlined_call_operand.vmem [shape: f32[1,64], index: 2, kind: input, shape index: {}]
  %s3 = inlined_call_operand.vmem [shape: f32[64,32], index: 3, kind: input, shape index: {}]
  %s4 = inlined_call_operand.vmem [shape: f32[1,32], index: 4, kind: input, shape index: {}]
  %s5 = inlined_call_operand.hbm [shape: f32[16,32], index: 5, kind: output, shape index: {}]
  %s6 = sld [smem:[#allocation0]]
  $region30: #{tpu_custom_call.1} parent=0
    _
  %s8 = ssub.s32 1, %s6
  %s9 = scalar_select 0, %s8, %s6
  $region1: #{tpu_custom_call.1} parent=0
    #allocation2 [shape = 'u8[8192]{0}', space=vmem, size = 0x2000, scoped, tag = 'output window, operand 0, single buffered']
    #allocation3 [shape = 's32[1]{0}', space=sflag, size = 0x4, scoped, tag = 'scoped memory for tpu_custom_call.1']
    %10 = vsyncpa [#allocation3], 0
    // Predicated region
    $region2: #{tpu_custom_call.1} parent=1 // pred_check
      _
    $region3: #{tpu_custom_call.1} parent=1 // pred_check_branch
      %12 = sbr.rel (0) target = $region5
    $region4: #{tpu_custom_call.1} parent=1 // pred_region
      _
    $region5: #{tpu_custom_call.1} parent=1 // pred_fallthru
      _
    // Predicated region
    $region6: #{tpu_custom_call.1} parent=1 // pred_check
      _
    $region7: #{tpu_custom_call.1} parent=1 // pred_check_branch
      %14 = sbr.rel (0) target = $region9
    $region8: #{tpu_custom_call.1} parent=1 // pred_region
      _
    $region9: #{tpu_custom_call.1} parent=1 // pred_fallthru
      _
    // Predicated region
    $region10: #{tpu_custom_call.1} parent=1 // pred_check
      _
    $region11: #{tpu_custom_call.1} parent=1 // pred_check_branch
      %16 = sbr.rel (0) target = $region13
    $region12: #{tpu_custom_call.1} parent=1 // pred_region
      _
    $region13: #{tpu_custom_call.1} parent=1 // pred_fallthru
      _
    // Predicated region
    $region14: #{tpu_custom_call.1} parent=1 // pred_check
      _
    $region15: #{tpu_custom_call.1} parent=1 // pred_check_branch
      %18 = sbr.rel (0) target = $region17
    $region16: #{tpu_custom_call.1} parent=1 // pred_region
      _
    $region17: #{tpu_custom_call.1} parent=1 // pred_fallthru
      _
    // Predicated region
    $region18: #{tpu_custom_call.1} parent=1 // pred_check
      _
    $region19: #{tpu_custom_call.1} parent=1 // pred_check_branch
      %20 = sbr.rel (0) target = $region21
    $region20: #{tpu_custom_call.1} parent=1 // pred_region
      _
    $region21: #{tpu_custom_call.1} parent=1 // pred_fallthru
      _
    %v21 = vld [vmem:[%s0] sm:$0xff]
    %v22 = vld [vmem:[%s0 + $0x8] sm:$0xff]
    %v23 = vld [vmem:[%s1] sm:$0xff]
    %v24 = vld [vmem:[%s1 + $0x8] sm:$0xff]
    %v25 = vld [vmem:[%s1 + $0x10] sm:$0xff]
    %v26 = vld [vmem:[%s1 + $0x18] sm:$0xff]
    %v27 = vld [vmem:[%s2] sm:$0x1]
    %v29 = vperm.slane %v27, 0
    %vm31 = vcmask 261120
    %v33 = vsel %vm31, %v21, 0
    %v36 = vsel %vm31, %v22, 0
    %38 = vmatpush.msra.mxu0 0.0
    %39 = vmatpush.msra.mxu0 0.0
    %40 = vmatpush.msra.mxu0 0.0
    %41 = vmatpush.msra.mxu0 0.0
    %42 = vmatpush.msra.mxu0 0.0
    %43 = vmatpush.msra.mxu0 0.0
    %44 = vmatpush.msra.mxu0 0.0
    %45 = vmatpush.msra.mxu0 0.0
    %46 = vmatpush.msra.mxu0 0.0
    %47 = vmatpush.msra.mxu0 0.0
    %48 = vmatpush.msra.mxu0 0.0
    %49 = vmatpush.msra.mxu0 0.0
    %50 = vmatpush.msra.mxu0 %v26
    %51 = vmatpush.msra.mxu0 %v25
    %52 = vmatpush.msra.mxu0 %v24
    %53 = vmatpush.msra.mxu0 %v23
    %54 = vmatmul.f32.gmra.mxu0 %v33
    %v55 = vpop.f32.mrf.mxu0
    %v56 = vadd.f32 %v29, %v55
    %57 = vmatmul.f32.gmra.mxu0 %v36
    %v58 = vpop.f32.mrf.mxu0
    %v59 = vadd.f32 %v29, %v58
    %60 = vdwg.mxu0
    %v61 = vmax.f32 %v56, 0.0
    %v62 = vmax.f32 %v59, 0.0
    %v63 = vld [vmem:[%s3] sm:$0xff]
    %v64 = vld [vmem:[%s3 + $0x8] sm:$0xff]
    %v65 = vld [vmem:[%s3 + $0x10] sm:$0xff]
    %v66 = vld [vmem:[%s3 + $0x18] sm:$0xff]
    %v67 = vld [vmem:[%s3 + $0x20] sm:$0xff]
    %v68 = vld [vmem:[%s3 + $0x28] sm:$0xff]
    %v69 = vld [vmem:[%s3 + $0x30] sm:$0xff]
    %v70 = vld [vmem:[%s3 + $0x38] sm:$0xff]
    %v71 = vld [vmem:[%s4] sm:$0x1]
    %v73 = vperm.slane %v71, 0
    %vm75 = vcmask 523264
    %v77 = vsel %vm75, %v61, 0
    %v80 = vsel %vm75, %v62, 0
    %82 = vmatpush.msra.mxu0 0.0
    %83 = vmatpush.msra.mxu0 0.0
    %84 = vmatpush.msra.mxu0 0.0
    %85 = vmatpush.msra.mxu0 0.0
    %86 = vmatpush.msra.mxu0 0.0
    %87 = vmatpush.msra.mxu0 0.0
    %88 = vmatpush.msra.mxu0 0.0
    %89 = vmatpush.msra.mxu0 0.0
    %90 = vmatpush.msra.mxu0 %v70
    %91 = vmatpush.msra.mxu0 %v69
    %92 = vmatpush.msra.mxu0 %v68
    %93 = vmatpush.msra.mxu0 %v67
    %94 = vmatpush.msra.mxu0 %v66
    %95 = vmatpush.msra.mxu0 %v65
    %96 = vmatpush.msra.mxu0 %v64
    %97 = vmatpush.msra.mxu0 %v63
    %98 = vmatmul.f32.gmra.mxu0 %v77
    %v99 = vpop.f32.mrf.mxu0
    %v100 = vadd.f32 %v73, %v99
    %101 = vmatmul.f32.gmra.mxu0 %v80
    %v102 = vpop.f32.mrf.mxu0
    %v103 = vadd.f32 %v73, %v102
    %104 = vdwg.mxu0
    %105 = vst.msk [vmem:[#allocation2] sm:$0xff] %vm31, %v100
    %106 = vst.msk [vmem:[#allocation2 + $0x8] sm:$0xff] %vm31, %v103
    // Predicated region
    $region22: #{tpu_custom_call.1} parent=1 // pred_check
      _
    $region23: #{tpu_custom_call.1} parent=1 // pred_check_branch
      %108 = sbr.rel (0) target = $region25
    $region24: #{tpu_custom_call.1} parent=1 // pred_region
      %110 = vsyncadd [#allocation3], 0
      %s111 = sshll.u32 [#allocation2], 4
      %s112 = int_to_ptr.vmem [resolvable:$true] %s111
      %s113 = sshll.u32 %s5, 4
      %s114 = int_to_ptr.hbm [resolvable:$true] %s113
      %119 = dma.vmem_to_hbm [thread:$0]  %s112, 256, %s114, [#allocation3], 128, 128, 8
    $region25: #{tpu_custom_call.1} parent=1 // pred_fallthru
      _
    // Predicated region
    $region26: #{tpu_custom_call.1} parent=1 // pred_check
      _
    $region27: #{tpu_custom_call.1} parent=1 // pred_check_branch
      %121 = sbr.rel (0) target = $region29
    $region28: #{tpu_custom_call.1} parent=1 // pred_region
      %123 = dma.done [#allocation3], 256
    $region29: #{tpu_custom_call.1} parent=1 // pred_fallthru
      _
    %124 = vsyncpa [#allocation3], 1

</llo_original>
